<compile_context>
chip_gen: v5e
topology: v5e:2x2
jax: 0.10.0
libtpu: 0.0.40
codegen_flags: <defaults>
</compile_context>

<pallas_src>
import jax
import jax.numpy as jnp
from jax.experimental import pallas as pl
from jax.experimental.pallas import tpu as pltpu


def _mf_tile_kernel(uidx_ref, iidx_ref, w_ref, h_ref, o_ref, *emb_refs):
    # uidx_ref / iidx_ref : (TB, 1) int32 index columns for this batch tile
    # w_ref               : (num_users, K) embedding table, VMEM-resident
    # h_ref               : (num_items, K) embedding table, VMEM-resident
    # o_ref               : (1, TB) lane-dense per-row dot products
    # emb_refs (training) : (TB, K) gathered U / V embeddings
    nu, k = w_ref.shape
    ni = h_ref.shape[0]
    tb = uidx_ref.shape[0]
    tdt = w_ref.dtype

    # One-hot selection matrices: 2-D iota along the table axis vs. the index
    # column (lane-broadcast compare on the VPU).
    u_oh = (jax.lax.broadcasted_iota(jnp.int32, (tb, nu), 1)
            == uidx_ref[...]).astype(tdt)
    i_oh = (jax.lax.broadcasted_iota(jnp.int32, (tb, ni), 1)
            == iidx_ref[...]).astype(tdt)

    # MXU gather: (TB, N) @ (N, K) -> (TB, K), f32 accumulate (exact: 0/1 weights).
    u = jnp.dot(u_oh, w_ref[...], preferred_element_type=jnp.float32)
    v = jnp.dot(i_oh, h_ref[...], preferred_element_type=jnp.float32)

    prod = u * v  # (TB, K) f32 on the VPU

    # Lane-dense per-row dot product: (1, K) . (TB, K)^T -> (1, TB) on the MXU.
    ones_k = jnp.ones((1, k), jnp.float32)
    o_ref[...] = jax.lax.dot_general(
        ones_k, prod, (((1,), (1,)), ((), ())),
        preferred_element_type=jnp.float32)

    if emb_refs:  # training mode: also write the gathered embeddings
        u_out_ref, v_out_ref = emb_refs
        u_out_ref[...] = u
        v_out_ref[...] = v


def _round_up(n, m):
    return ((n + m - 1) // m) * m


def mf_forward(x, W, H, is_training=False, max_tile_b=512):
    """Pallas TPU forward of MF_BaseModel.

    x: [B, 2] integer array (user_idx, item_idx)
    W: [num_users, K] embedding table
    H: [num_items, K] embedding table
    """
    B = x.shape[0]
    num_users, K = W.shape
    num_items = H.shape[0]

    # Batch tile size: a multiple of 128 lanes, capped at max_tile_b.
    TB = _round_up(min(max_tile_b, _round_up(B, 128)), 128)
    B_pad = _round_up(B, TB)
    num_tiles = B_pad // TB

    # Index columns, padded with 0 (a valid row); padded outputs are sliced off.
    uidx = jnp.zeros((B_pad, 1), jnp.int32).at[:B, 0].set(x[:, 0].astype(jnp.int32))
    iidx = jnp.zeros((B_pad, 1), jnp.int32).at[:B, 0].set(x[:, 1].astype(jnp.int32))

    # Explicit VMEM budget: resident tables + double-buffered I/O tiles + headroom.
    table_bytes = (num_users + num_items) * K * W.dtype.itemsize
    vmem_limit = int(min(110 * 1024 * 1024,
                         max(32 * 1024 * 1024, table_bytes + 16 * 1024 * 1024)))

    idx_spec = pl.BlockSpec((TB, 1), lambda t: (t, 0))
    in_specs = [
        idx_spec,                                         # user indices (tiled)
        idx_spec,                                         # item indices (tiled)
        pl.BlockSpec((num_users, K), lambda t: (0, 0)),   # W: VMEM-resident
        pl.BlockSpec((num_items, K), lambda t: (0, 0)),   # H: VMEM-resident
    ]
    o_spec = pl.BlockSpec((1, TB), lambda t: (0, t))      # lane-dense output slab

    if is_training:
        out_shape = (
            jax.ShapeDtypeStruct((1, B_pad), jnp.float32),
            jax.ShapeDtypeStruct((B_pad, K), jnp.float32),
            jax.ShapeDtypeStruct((B_pad, K), jnp.float32),
        )
        out_specs = (
            o_spec,
            pl.BlockSpec((TB, K), lambda t: (t, 0)),
            pl.BlockSpec((TB, K), lambda t: (t, 0)),
        )
    else:
        out_shape = jax.ShapeDtypeStruct((1, B_pad), jnp.float32)
        out_specs = o_spec

    result = pl.pallas_call(
        _mf_tile_kernel,
        grid=(num_tiles,),
        in_specs=in_specs,
        out_specs=out_specs,
        out_shape=out_shape,
        compiler_params=pltpu.CompilerParams(
            dimension_semantics=("parallel",),  # batch tiles are independent
            vmem_limit_bytes=vmem_limit,
        ),
    )(uidx, iidx, W, H)

    if is_training:
        out2d, u_emb, v_emb = result
        return out2d[0, :B], u_emb[:B], v_emb[:B]
    return result[0, :B]


if __name__ == "__main__":
    # Deterministic synthetic parameters / inputs (nn.Embedding default init ~ N(0,1)).
    num_users, num_items, embedding_k = 10, 12, 4
    batch = 8

    key = jax.random.PRNGKey(0)
    kW, kH, ku, ki = jax.random.split(key, 4)
    W = jax.random.normal(kW, (num_users, embedding_k), dtype=jnp.float32)
    H = jax.random.normal(kH, (num_items, embedding_k), dtype=jnp.float32)

    user_idx = jax.random.randint(ku, (batch,), 0, num_users, dtype=jnp.int32)
    item_idx = jax.random.randint(ki, (batch,), 0, num_items, dtype=jnp.int32)
    x = jnp.stack([user_idx, item_idx], axis=1)  # [B, 2]

    # Inference path.
    out = mf_forward(x, W, H, is_training=False)
    out = jax.block_until_ready(out)

    # Pure-JAX reference (same semantics as the PyTorch forward).
    U_ref = W[user_idx]
    V_ref = H[item_idx]
    ref = jnp.sum(U_ref * V_ref, axis=1)
    assert out.shape == (batch,)
    assert jnp.allclose(out, ref, atol=1e-5, rtol=1e-5)

    # Training path (out, U_emb, V_emb).
    out_t, u_emb, v_emb = mf_forward(x, W, H, is_training=True)
    jax.block_until_ready((out_t, u_emb, v_emb))
    assert jnp.allclose(out_t, ref, atol=1e-5, rtol=1e-5)
    assert jnp.allclose(u_emb, U_ref, atol=1e-6)
    assert jnp.allclose(v_emb, V_ref, atol=1e-6)

    print("KERNEL_OK")
</pallas_src>

<mosaic_0001>
module attributes {stable_mosaic.version = 11 : i64} {
  func.func @_mf_tile_kernel(%arg0: i32, %arg1: memref<128x1xi32, #tpu.memory_space<vmem>>, %arg2: memref<128x1xi32, #tpu.memory_space<vmem>>, %arg3: memref<10x4xf32, #tpu.memory_space<vmem>>, %arg4: memref<12x4xf32, #tpu.memory_space<vmem>>, %arg5: memref<1x128xf32, #tpu.memory_space<vmem>>) attributes {dimension_semantics = [#tpu.dimension_semantics<parallel>], iteration_bounds = array<i64: 1>, scalar_prefetch = 0 : i64, scratch_operands = 0 : i64, tpu.core_type = #tpu.core_type<tc>, window_params = [{transform_indices = @transform_0, window_bounds = array<i64: 128, 1>}, {transform_indices = @transform_1, window_bounds = array<i64: 128, 1>}, {pipeline_mode = #tpu.pipeline_mode<synchronous>, transform_indices = @transform_2, window_bounds = array<i64: 10, 4>}, {pipeline_mode = #tpu.pipeline_mode<synchronous>, transform_indices = @transform_3, window_bounds = array<i64: 12, 4>}, {transform_indices = @transform_4, window_bounds = array<i64: 1, 128>}]} {
    %0 = tpu.iota {dimensions = array<i32: 1>} : vector<128x10xi32>
    %c0 = arith.constant 0 : index
    %c0_0 = arith.constant 0 : index
    %1 = vector.load %arg1[%c0, %c0_0] : memref<128x1xi32, #tpu.memory_space<vmem>>, vector<128x1xi32>
    %2 = vector.broadcast %1 : vector<128x1xi32> to vector<128x10xi32>
    %3 = arith.cmpi eq, %0, %2 : vector<128x10xi32>
    %4 = arith.extui %3 : vector<128x10xi1> to vector<128x10xi32>
    %5 = arith.sitofp %4 : vector<128x10xi32> to vector<128x10xf32>
    %6 = tpu.iota {dimensions = array<i32: 1>} : vector<128x12xi32>
    %c0_1 = arith.constant 0 : index
    %c0_2 = arith.constant 0 : index
    %7 = vector.load %arg2[%c0_1, %c0_2] : memref<128x1xi32, #tpu.memory_space<vmem>>, vector<128x1xi32>
    %8 = vector.broadcast %7 : vector<128x1xi32> to vector<128x12xi32>
    %9 = arith.cmpi eq, %6, %8 : vector<128x12xi32>
    %10 = arith.extui %9 : vector<128x12xi1> to vector<128x12xi32>
    %11 = arith.sitofp %10 : vector<128x12xi32> to vector<128x12xf32>
    %c0_3 = arith.constant 0 : index
    %c0_4 = arith.constant 0 : index
    %12 = vector.load %arg3[%c0_3, %c0_4] : memref<10x4xf32, #tpu.memory_space<vmem>>, vector<10x4xf32>
    %cst = arith.constant dense<0.000000e+00> : vector<128x4xf32>
    %13 = tpu.matmul %5, %12, %cst {dimension_numbers = #tpu.dot_dimension_numbers<[1], [0], [0], [1], [0, 0, 1, 1], [], []>} : vector<128x10xf32>, vector<10x4xf32>, vector<128x4xf32> -> vector<128x4xf32>
    %c0_5 = arith.constant 0 : index
    %c0_6 = arith.constant 0 : index
    %14 = vector.load %arg4[%c0_5, %c0_6] : memref<12x4xf32, #tpu.memory_space<vmem>>, vector<12x4xf32>
    %cst_7 = arith.constant dense<0.000000e+00> : vector<128x4xf32>
    %15 = tpu.matmul %11, %14, %cst_7 {dimension_numbers = #tpu.dot_dimension_numbers<[1], [0], [0], [1], [0, 0, 1, 1], [], []>} : vector<128x12xf32>, vector<12x4xf32>, vector<128x4xf32> -> vector<128x4xf32>
    %16 = arith.mulf %13, %15 : vector<128x4xf32>
    %cst_8 = arith.constant 1.000000e+00 : f32
    %17 = vector.broadcast %cst_8 : f32 to vector<1x4xf32>
    %cst_9 = arith.constant dense<0.000000e+00> : vector<1x128xf32>
    %18 = tpu.matmul %17, %16, %cst_9 {dimension_numbers = #tpu.dot_dimension_numbers<[1], [1], [0], [0], [0, 0, 1, 0], [], []>} : vector<1x4xf32>, vector<128x4xf32>, vector<1x128xf32> -> vector<1x128xf32>
    %c0_10 = arith.constant 0 : index
    %c0_11 = arith.constant 0 : index
    %19 = vector.load %arg5[%c0_10, %c0_11] : memref<1x128xf32, #tpu.memory_space<vmem>>, vector<1x128xf32>
    tpu.vector_store %arg5[%c0_10, %c0_11], %18 {strides = array<i32>} : memref<1x128xf32, #tpu.memory_space<vmem>>, vector<1x128xf32>,
    return
  }
  func.func @transform_0(%arg0: i32) -> (i32, i32) {
    %c0_i32 = arith.constant 0 : i32
    %c0_i32_0 = arith.constant 0 : i32
    return %arg0, %c0_i32 : i32, i32
  }
  func.func @transform_1(%arg0: i32) -> (i32, i32) {
    %c0_i32 = arith.constant 0 : i32
    %c0_i32_0 = arith.constant 0 : i32
    return %arg0, %c0_i32 : i32, i32
  }
  func.func @transform_2(%arg0: i32) -> (i32, i32) {
    %c0_i32 = arith.constant 0 : i32
    %c0_i32_0 = arith.constant 0 : i32
    %c0_i32_1 = arith.constant 0 : i32
    return %c0_i32, %c0_i32_0 : i32, i32
  }
  func.func @transform_3(%arg0: i32) -> (i32, i32) {
    %c0_i32 = arith.constant 0 : i32
    %c0_i32_0 = arith.constant 0 : i32
    %c0_i32_1 = arith.constant 0 : i32
    return %c0_i32, %c0_i32_0 : i32, i32
  }
  func.func @transform_4(%arg0: i32) -> (i32, i32) {
    %c0_i32 = arith.constant 0 : i32
    %c0_i32_0 = arith.constant 0 : i32
    return %c0_i32, %arg0 : i32, i32
  }
}

</mosaic_0001>

<llo_original>
// kernel: tpu_custom_call.1
$region0: #{tpu_custom_call.1}
  #allocation0 [shape = 'u32[]', space=smem, size = 0x4, offset = 0x4, fixed_abs, tag = 'smem constant byte address 0x4 - core index']
  #allocation1 [shape = 'u32[72,128]{1,0:T(1,128)}', space=vmem, size = 0x9000, scoped, tag = 'internal scratch']
  %s0 = inlined_call_operand.vmem [shape: s32[128,1], index: 0, kind: input, shape index: {}]
  %s1 = inlined_call_operand.vmem [shape: s32[128,1], index: 1, kind: input, shape index: {}]
  %s2 = inlined_call_operand.vmem [shape: f32[10,4], index: 2, kind: input, shape index: {}]
  %s3 = inlined_call_operand.vmem [shape: f32[12,4], index: 3, kind: input, shape index: {}]
  %s4 = inlined_call_operand.hbm [shape: f32[1,128], index: 4, kind: output, shape index: {}]
  %s5 = sld [smem:[#allocation0]]
  $region26: #{tpu_custom_call.1} parent=0
    _
  %s7 = ssub.s32 1, %s5
  %s8 = scalar_select 0, %s7, %s5
  $region1: #{tpu_custom_call.1} parent=0
    #allocation2 [shape = 'u8[512]{0}', space=vmem, size = 0x400, scoped, tag = 'output window, operand 0, single buffered']
    #allocation3 [shape = 's32[1]{0}', space=sflag, size = 0x4, scoped, tag = 'scoped memory for tpu_custom_call.1']
    %9 = vsyncpa [#allocation3], 0
    // Predicated region
    $region2: #{tpu_custom_call.1} parent=1 // pred_check
      _
    $region3: #{tpu_custom_call.1} parent=1 // pred_check_branch
      %11 = sbr.rel (0) target = $region5
    $region4: #{tpu_custom_call.1} parent=1 // pred_region
      _
    $region5: #{tpu_custom_call.1} parent=1 // pred_fallthru
      _
    // Predicated region
    $region6: #{tpu_custom_call.1} parent=1 // pred_check
      _
    $region7: #{tpu_custom_call.1} parent=1 // pred_check_branch
      %13 = sbr.rel (0) target = $region9
    $region8: #{tpu_custom_call.1} parent=1 // pred_region
      _
    $region9: #{tpu_custom_call.1} parent=1 // pred_fallthru
      _
    // Predicated region
    $region10: #{tpu_custom_call.1} parent=1 // pred_check
      _
    $region11: #{tpu_custom_call.1} parent=1 // pred_check_branch
      %15 = sbr.rel (0) target = $region13
    $region12: #{tpu_custom_call.1} parent=1 // pred_region
      _
    $region13: #{tpu_custom_call.1} parent=1 // pred_fallthru
      _
    // Predicated region
    $region14: #{tpu_custom_call.1} parent=1 // pred_check
      _
    $region15: #{tpu_custom_call.1} parent=1 // pred_check_branch
      %17 = sbr.rel (0) target = $region17
    $region16: #{tpu_custom_call.1} parent=1 // pred_region
      _
    $region17: #{tpu_custom_call.1} parent=1 // pred_fallthru
      _
    %v18 = vlaneseq
    %v19 = vand.u32 %v18, 127
    %v20 = vld [vmem:[%s0] sm:$0xff]
    %v21 = vld [vmem:[%s0 + $0x8] sm:$0xff]
    %v22 = vld [vmem:[%s0 + $0x10] sm:$0xff]
    %v23 = vld [vmem:[%s0 + $0x18] sm:$0xff]
    %v24 = vld [vmem:[%s0 + $0x20] sm:$0xff]
    %v25 = vld [vmem:[%s0 + $0x28] sm:$0xff]
    %v26 = vld [vmem:[%s0 + $0x30] sm:$0xff]
    %v27 = vld [vmem:[%s0 + $0x38] sm:$0xff]
    %v28 = vld [vmem:[%s0 + $0x40] sm:$0xff]
    %v29 = vld [vmem:[%s0 + $0x48] sm:$0xff]
    %v30 = vld [vmem:[%s0 + $0x50] sm:$0xff]
    %v31 = vld [vmem:[%s0 + $0x58] sm:$0xff]
    %v32 = vld [vmem:[%s0 + $0x60] sm:$0xff]
    %v33 = vld [vmem:[%s0 + $0x68] sm:$0xff]
    %v34 = vld [vmem:[%s0 + $0x70] sm:$0xff]
    %v35 = vld [vmem:[%s0 + $0x78] sm:$0xff]
    %36 = vset.pattern.permute.xlu0 0
    %37 = vperm.xlu0 %36, %v20
    %v38 = vpop.permute.xlu0 %37
    %39 = vset.pattern.permute.xlu0 0
    %40 = vperm.xlu0 %39, %v21
    %v41 = vpop.permute.xlu0 %40
    %42 = vset.pattern.permute.xlu0 0
    %43 = vperm.xlu0 %42, %v22
    %v44 = vpop.permute.xlu0 %43
    %45 = vset.pattern.permute.xlu0 0
    %46 = vperm.xlu0 %45, %v23
    %v47 = vpop.permute.xlu0 %46
    %48 = vset.pattern.permute.xlu0 0
    %49 = vperm.xlu0 %48, %v24
    %v50 = vpop.permute.xlu0 %49
    %51 = vset.pattern.permute.xlu0 0
    %52 = vperm.xlu0 %51, %v25
    %v53 = vpop.permute.xlu0 %52
    %54 = vset.pattern.permute.xlu0 0
    %55 = vperm.xlu0 %54, %v26
    %v56 = vpop.permute.xlu0 %55
    %57 = vset.pattern.permute.xlu0 0
    %58 = vperm.xlu0 %57, %v27
    %v59 = vpop.permute.xlu0 %58
    %60 = vset.pattern.permute.xlu0 0
    %61 = vperm.xlu0 %60, %v28
    %v62 = vpop.permute.xlu0 %61
    %63 = vset.pattern.permute.xlu0 0
    %64 = vperm.xlu0 %63, %v29
    %v65 = vpop.permute.xlu0 %64
    %66 = vset.pattern.permute.xlu0 0
    %67 = vperm.xlu0 %66, %v30
    %v68 = vpop.permute.xlu0 %67
    %69 = vset.pattern.permute.xlu0 0
    %70 = vperm.xlu0 %69, %v31
    %v71 = vpop.permute.xlu0 %70
    %72 = vset.pattern.permute.xlu0 0
    %73 = vperm.xlu0 %72, %v32
    %v74 = vpop.permute.xlu0 %73
    %75 = vset.pattern.permute.xlu0 0
    %76 = vperm.xlu0 %75, %v33
    %v77 = vpop.permute.xlu0 %76
    %78 = vset.pattern.permute.xlu0 0
    %79 = vperm.xlu0 %78, %v34
    %v80 = vpop.permute.xlu0 %79
    %81 = vset.pattern.permute.xlu0 0
    %82 = vperm.xlu0 %81, %v35
    %v83 = vpop.permute.xlu0 %82
    %vm84 = vcmp.eq.s32.totalorder %v19, %v38
    %vm85 = vcmp.eq.s32.totalorder %v19, %v41
    %vm86 = vcmp.eq.s32.totalorder %v19, %v44
    %vm87 = vcmp.eq.s32.totalorder %v19, %v47
    %vm88 = vcmp.eq.s32.totalorder %v19, %v50
    %vm89 = vcmp.eq.s32.totalorder %v19, %v53
    %vm90 = vcmp.eq.s32.totalorder %v19, %v56
    %vm91 = vcmp.eq.s32.totalorder %v19, %v59
    %vm92 = vcmp.eq.s32.totalorder %v19, %v62
    %vm93 = vcmp.eq.s32.totalorder %v19, %v65
    %vm94 = vcmp.eq.s32.totalorder %v19, %v68
    %vm95 = vcmp.eq.s32.totalorder %v19, %v71
    %vm96 = vcmp.eq.s32.totalorder %v19, %v74
    %vm97 = vcmp.eq.s32.totalorder %v19, %v77
    %vm98 = vcmp.eq.s32.totalorder %v19, %v80
    %vm99 = vcmp.eq.s32.totalorder %v19, %v83
    %v100 = vsel %vm84, 1, 0
    %v101 = vsel %vm85, 1, 0
    %v102 = vsel %vm86, 1, 0
    %v103 = vsel %vm87, 1, 0
    %v104 = vsel %vm88, 1, 0
    %v105 = vsel %vm89, 1, 0
    %v106 = vsel %vm90, 1, 0
    %v107 = vsel %vm91, 1, 0
    %v108 = vsel %vm92, 1, 0
    %v109 = vsel %vm93, 1, 0
    %v110 = vsel %vm94, 1, 0
    %v111 = vsel %vm95, 1, 0
    %v112 = vsel %vm96, 1, 0
    %v113 = vsel %vm97, 1, 0
    %v114 = vsel %vm98, 1, 0
    %v115 = vsel %vm99, 1, 0
    %v116 = vcvt.s32.f32 %v100
    %v117 = vcvt.s32.f32 %v101
    %v118 = vcvt.s32.f32 %v102
    %v119 = vcvt.s32.f32 %v103
    %v120 = vcvt.s32.f32 %v104
    %v121 = vcvt.s32.f32 %v105
    %v122 = vcvt.s32.f32 %v106
    %v123 = vcvt.s32.f32 %v107
    %v124 = vcvt.s32.f32 %v108
    %v125 = vcvt.s32.f32 %v109
    %v126 = vcvt.s32.f32 %v110
    %v127 = vcvt.s32.f32 %v111
    %v128 = vcvt.s32.f32 %v112
    %v129 = vcvt.s32.f32 %v113
    %v130 = vcvt.s32.f32 %v114
    %v131 = vcvt.s32.f32 %v115
    %v132 = vld [vmem:[%s1] sm:$0xff]
    %v133 = vld [vmem:[%s1 + $0x8] sm:$0xff]
    %v134 = vld [vmem:[%s1 + $0x10] sm:$0xff]
    %v135 = vld [vmem:[%s1 + $0x18] sm:$0xff]
    %v136 = vld [vmem:[%s1 + $0x20] sm:$0xff]
    %v137 = vld [vmem:[%s1 + $0x28] sm:$0xff]
    %v138 = vld [vmem:[%s1 + $0x30] sm:$0xff]
    %v139 = vld [vmem:[%s1 + $0x38] sm:$0xff]
    %v140 = vld [vmem:[%s1 + $0x40] sm:$0xff]
    %v141 = vld [vmem:[%s1 + $0x48] sm:$0xff]
    %v142 = vld [vmem:[%s1 + $0x50] sm:$0xff]
    %v143 = vld [vmem:[%s1 + $0x58] sm:$0xff]
    %v144 = vld [vmem:[%s1 + $0x60] sm:$0xff]
    %v145 = vld [vmem:[%s1 + $0x68] sm:$0xff]
    %v146 = vld [vmem:[%s1 + $0x70] sm:$0xff]
    %v147 = vld [vmem:[%s1 + $0x78] sm:$0xff]
    %148 = vset.pattern.permute.xlu0 0
    %149 = vperm.xlu0 %148, %v132
    %v150 = vpop.permute.xlu0 %149
    %151 = vset.pattern.permute.xlu0 0
    %152 = vperm.xlu0 %151, %v133
    %v153 = vpop.permute.xlu0 %152
    %154 = vset.pattern.permute.xlu0 0
    %155 = vperm.xlu0 %154, %v134
    %v156 = vpop.permute.xlu0 %155
    %157 = vset.pattern.permute.xlu0 0
    %158 = vperm.xlu0 %157, %v135
    %v159 = vpop.permute.xlu0 %158
    %160 = vset.pattern.permute.xlu0 0
    %161 = vperm.xlu0 %160, %v136
    %v162 = vpop.permute.xlu0 %161
    %163 = vset.pattern.permute.xlu0 0
    %164 = vperm.xlu0 %163, %v137
    %v165 = vpop.permute.xlu0 %164
    %166 = vset.pattern.permute.xlu0 0
    %167 = vperm.xlu0 %166, %v138
    %v168 = vpop.permute.xlu0 %167
    %169 = vset.pattern.permute.xlu0 0
    %170 = vperm.xlu0 %169, %v139
    %v171 = vpop.permute.xlu0 %170
    %172 = vset.pattern.permute.xlu0 0
    %173 = vperm.xlu0 %172, %v140
    %v174 = vpop.permute.xlu0 %173
    %175 = vset.pattern.permute.xlu0 0
    %176 = vperm.xlu0 %175, %v141
    %v177 = vpop.permute.xlu0 %176
    %178 = vset.pattern.permute.xlu0 0
    %179 = vperm.xlu0 %178, %v142
    %v180 = vpop.permute.xlu0 %179
    %181 = vset.pattern.permute.xlu0 0
    %182 = vperm.xlu0 %181, %v143
    %v183 = vpop.permute.xlu0 %182
    %184 = vset.pattern.permute.xlu0 0
    %185 = vperm.xlu0 %184, %v144
    %v186 = vpop.permute.xlu0 %185
    %187 = vset.pattern.permute.xlu0 0
    %188 = vperm.xlu0 %187, %v145
    %v189 = vpop.permute.xlu0 %188
    %190 = vset.pattern.permute.xlu0 0
    %191 = vperm.xlu0 %190, %v146
    %v192 = vpop.permute.xlu0 %191
    %193 = vset.pattern.permute.xlu0 0
    %194 = vperm.xlu0 %193, %v147
    %v195 = vpop.permute.xlu0 %194
    %vm196 = vcmp.eq.s32.totalorder %v19, %v150
    %vm197 = vcmp.eq.s32.totalorder %v19, %v153
    %vm198 = vcmp.eq.s32.totalorder %v19, %v156
    %vm199 = vcmp.eq.s32.totalorder %v19, %v159
    %vm200 = vcmp.eq.s32.totalorder %v19, %v162
    %vm201 = vcmp.eq.s32.totalorder %v19, %v165
    %vm202 = vcmp.eq.s32.totalorder %v19, %v168
    %vm203 = vcmp.eq.s32.totalorder %v19, %v171
    %vm204 = vcmp.eq.s32.totalorder %v19, %v174
    %vm205 = vcmp.eq.s32.totalorder %v19, %v177
    %vm206 = vcmp.eq.s32.totalorder %v19, %v180
    %vm207 = vcmp.eq.s32.totalorder %v19, %v183
    %vm208 = vcmp.eq.s32.totalorder %v19, %v186
    %vm209 = vcmp.eq.s32.totalorder %v19, %v189
    %vm210 = vcmp.eq.s32.totalorder %v19, %v192
    %vm211 = vcmp.eq.s32.totalorder %v19, %v195
    %v212 = vsel %vm196, 1, 0
    %v213 = vsel %vm197, 1, 0
    %v214 = vsel %vm198, 1, 0
    %v215 = vsel %vm199, 1, 0
    %v216 = vsel %vm200, 1, 0
    %v217 = vsel %vm201, 1, 0
    %v218 = vsel %vm202, 1, 0
    %v219 = vsel %vm203, 1, 0
    %v220 = vsel %vm204, 1, 0
    %v221 = vsel %vm205, 1, 0
    %v222 = vsel %vm206, 1, 0
    %v223 = vsel %vm207, 1, 0
    %v224 = vsel %vm208, 1, 0
    %v225 = vsel %vm209, 1, 0
    %v226 = vsel %vm210, 1, 0
    %v227 = vsel %vm211, 1, 0
    %v228 = vcvt.s32.f32 %v212
    %v229 = vcvt.s32.f32 %v213
    %v230 = vcvt.s32.f32 %v214
    %v231 = vcvt.s32.f32 %v215
    %v232 = vcvt.s32.f32 %v216
    %v233 = vcvt.s32.f32 %v217
    %v234 = vcvt.s32.f32 %v218
    %v235 = vcvt.s32.f32 %v219
    %v236 = vcvt.s32.f32 %v220
    %v237 = vcvt.s32.f32 %v221
    %v238 = vcvt.s32.f32 %v222
    %v239 = vcvt.s32.f32 %v223
    %v240 = vcvt.s32.f32 %v224
    %v241 = vcvt.s32.f32 %v225
    %v242 = vcvt.s32.f32 %v226
    %v243 = vcvt.s32.f32 %v227
    %v244 = vld [vmem:[%s2] sm:$0xff]
    %v245 = vld [vmem:[%s2 + $0x8] sm:$0x3]
    %vm246 = vcmask 80896
    %v248 = vsel %vm246, %v116, 0
    %v251 = vsel %vm246, %v117, 0
    %v254 = vsel %vm246, %v118, 0
    %v257 = vsel %vm246, %v119, 0
    %v260 = vsel %vm246, %v120, 0
    %v263 = vsel %vm246, %v121, 0
    %v266 = vsel %vm246, %v122, 0
    %v269 = vsel %vm246, %v123, 0
    %v272 = vsel %vm246, %v124, 0
    %v275 = vsel %vm246, %v125, 0
    %v278 = vsel %vm246, %v126, 0
    %v281 = vsel %vm246, %v127, 0
    %v284 = vsel %vm246, %v128, 0
    %v287 = vsel %vm246, %v129, 0
    %v290 = vsel %vm246, %v130, 0
    %v293 = vsel %vm246, %v131, 0
    %vm295 = vcmask 1041408
    %v297 = vsel %vm295, %v245, 0
    %299 = vmatpush.msra.mxu0 0.0
    %300 = vmatpush.msra.mxu0 0.0
    %301 = vmatpush.msra.mxu0 0.0
    %302 = vmatpush.msra.mxu0 0.0
    %303 = vmatpush.msra.mxu0 0.0
    %304 = vmatpush.msra.mxu0 0.0
    %305 = vmatpush.msra.mxu0 0.0
    %306 = vmatpush.msra.mxu0 0.0
    %307 = vmatpush.msra.mxu0 0.0
    %308 = vmatpush.msra.mxu0 0.0
    %309 = vmatpush.msra.mxu0 0.0
    %310 = vmatpush.msra.mxu0 0.0
    %311 = vmatpush.msra.mxu0 0.0
    %312 = vmatpush.msra.mxu0 0.0
    %313 = vmatpush.msra.mxu0 %v297
    %314 = vmatpush.msra.mxu0 %v244
    %315 = vmatmul.f32.gmra.mxu0 %v248
    %v316 = vpop.f32.mrf.mxu0
    %v317 = vadd.f32 0.0, %v316
    %318 = vmatmul.f32.gmra.mxu0 %v251
    %v319 = vpop.f32.mrf.mxu0
    %v320 = vadd.f32 0.0, %v319
    %321 = vmatmul.f32.gmra.mxu0 %v254
    %v322 = vpop.f32.mrf.mxu0
    %v323 = vadd.f32 0.0, %v322
    %324 = vmatmul.f32.gmra.mxu0 %v257
    %v325 = vpop.f32.mrf.mxu0
    %v326 = vadd.f32 0.0, %v325
    %327 = vmatmul.f32.gmra.mxu0 %v260
    %v328 = vpop.f32.mrf.mxu0
    %v329 = vadd.f32 0.0, %v328
    %330 = vmatmul.f32.gmra.mxu0 %v263
    %v331 = vpop.f32.mrf.mxu0
    %v332 = vadd.f32 0.0, %v331
    %333 = vmatmul.f32.gmra.mxu0 %v266
    %v334 = vpop.f32.mrf.mxu0
    %v335 = vadd.f32 0.0, %v334
    %336 = vmatmul.f32.gmra.mxu0 %v269
    %v337 = vpop.f32.mrf.mxu0
    %v338 = vadd.f32 0.0, %v337
    %339 = vmatmul.f32.gmra.mxu0 %v272
    %v340 = vpop.f32.mrf.mxu0
    %v341 = vadd.f32 0.0, %v340
    %342 = vmatmul.f32.gmra.mxu0 %v275
    %v343 = vpop.f32.mrf.mxu0
    %v344 = vadd.f32 0.0, %v343
    %345 = vmatmul.f32.gmra.mxu0 %v278
    %v346 = vpop.f32.mrf.mxu0
    %v347 = vadd.f32 0.0, %v346
    %348 = vmatmul.f32.gmra.mxu0 %v281
    %v349 = vpop.f32.mrf.mxu0
    %v350 = vadd.f32 0.0, %v349
    %351 = vmatmul.f32.gmra.mxu0 %v284
    %v352 = vpop.f32.mrf.mxu0
    %v353 = vadd.f32 0.0, %v352
    %354 = vmatmul.f32.gmra.mxu0 %v287
    %v355 = vpop.f32.mrf.mxu0
    %v356 = vadd.f32 0.0, %v355
    %357 = vmatmul.f32.gmra.mxu0 %v290
    %v358 = vpop.f32.mrf.mxu0
    %v359 = vadd.f32 0.0, %v358
    %360 = vmatmul.f32.gmra.mxu0 %v293
    %v361 = vpop.f32.mrf.mxu0
    %v362 = vadd.f32 0.0, %v361
    %363 = vdwg.mxu0
    %v364 = vld [vmem:[%s3] sm:$0xff]
    %v365 = vld [vmem:[%s3 + $0x8] sm:$0xf]
    %vm366 = vcmask 97280
    %v368 = vsel %vm366, %v228, 0
    %v371 = vsel %vm366, %v229, 0
    %v374 = vsel %vm366, %v230, 0
    %v377 = vsel %vm366, %v231, 0
    %v380 = vsel %vm366, %v232, 0
    %v383 = vsel %vm366, %v233, 0
    %v386 = vsel %vm366, %v234, 0
    %v389 = vsel %vm366, %v235, 0
    %v392 = vsel %vm366, %v236, 0
    %v395 = vsel %vm366, %v237, 0
    %v398 = vsel %vm366, %v238, 0
    %v401 = vsel %vm366, %v239, 0
    %v404 = vsel %vm366, %v240, 0
    %v407 = vsel %vm366, %v241, 0
    %v410 = vsel %vm366, %v242, 0
    %v413 = vsel %vm366, %v243, 0
    %vm415 = vcmask 1043456
    %v417 = vsel %vm415, %v365, 0
    %419 = vmatpush.msra.mxu0 0.0
    %420 = vmatpush.msra.mxu0 0.0
    %421 = vmatpush.msra.mxu0 0.0
    %422 = vmatpush.msra.mxu0 0.0
    %423 = vmatpush.msra.mxu0 0.0
    %424 = vmatpush.msra.mxu0 0.0
    %425 = vmatpush.msra.mxu0 0.0
    %426 = vmatpush.msra.mxu0 0.0
    %427 = vmatpush.msra.mxu0 0.0
    %428 = vmatpush.msra.mxu0 0.0
    %429 = vmatpush.msra.mxu0 0.0
    %430 = vmatpush.msra.mxu0 0.0
    %431 = vmatpush.msra.mxu0 0.0
    %432 = vmatpush.msra.mxu0 0.0
    %433 = vmatpush.msra.mxu0 %v417
    %434 = vmatpush.msra.mxu0 %v364
    %435 = vmatmul.f32.gmra.mxu0 %v368
    %v436 = vpop.f32.mrf.mxu0
    %v437 = vadd.f32 0.0, %v436
    %438 = vmatmul.f32.gmra.mxu0 %v371
    %v439 = vpop.f32.mrf.mxu0
    %v440 = vadd.f32 0.0, %v439
    %441 = vmatmul.f32.gmra.mxu0 %v374
    %v442 = vpop.f32.mrf.mxu0
    %v443 = vadd.f32 0.0, %v442
    %444 = vmatmul.f32.gmra.mxu0 %v377
    %v445 = vpop.f32.mrf.mxu0
    %v446 = vadd.f32 0.0, %v445
    %447 = vmatmul.f32.gmra.mxu0 %v380
    %v448 = vpop.f32.mrf.mxu0
    %v449 = vadd.f32 0.0, %v448
    %450 = vmatmul.f32.gmra.mxu0 %v383
    %v451 = vpop.f32.mrf.mxu0
    %v452 = vadd.f32 0.0, %v451
    %453 = vmatmul.f32.gmra.mxu0 %v386
    %v454 = vpop.f32.mrf.mxu0
    %v455 = vadd.f32 0.0, %v454
    %456 = vmatmul.f32.gmra.mxu0 %v389
    %v457 = vpop.f32.mrf.mxu0
    %v458 = vadd.f32 0.0, %v457
    %459 = vmatmul.f32.gmra.mxu0 %v392
    %v460 = vpop.f32.mrf.mxu0
    %v461 = vadd.f32 0.0, %v460
    %462 = vmatmul.f32.gmra.mxu0 %v395
    %v463 = vpop.f32.mrf.mxu0
    %v464 = vadd.f32 0.0, %v463
    %465 = vmatmul.f32.gmra.mxu0 %v398
    %v466 = vpop.f32.mrf.mxu0
    %v467 = vadd.f32 0.0, %v466
    %468 = vmatmul.f32.gmra.mxu0 %v401
    %v469 = vpop.f32.mrf.mxu0
    %v470 = vadd.f32 0.0, %v469
    %471 = vmatmul.f32.gmra.mxu0 %v404
    %v472 = vpop.f32.mrf.mxu0
    %v473 = vadd.f32 0.0, %v472
    %474 = vmatmul.f32.gmra.mxu0 %v407
    %v475 = vpop.f32.mrf.mxu0
    %v476 = vadd.f32 0.0, %v475
    %477 = vmatmul.f32.gmra.mxu0 %v410
    %v478 = vpop.f32.mrf.mxu0
    %v479 = vadd.f32 0.0, %v478
    %480 = vmatmul.f32.gmra.mxu0 %v413
    %v481 = vpop.f32.mrf.mxu0
    %v482 = vadd.f32 0.0, %v481
    %483 = vdwg.mxu0
    %v484 = vmul.f32 %v317, %v437
    %v485 = vmul.f32 %v320, %v440
    %v486 = vmul.f32 %v323, %v443
    %v487 = vmul.f32 %v326, %v446
    %v488 = vmul.f32 %v329, %v449
    %v489 = vmul.f32 %v332, %v452
    %v490 = vmul.f32 %v335, %v455
    %v491 = vmul.f32 %v338, %v458
    %v492 = vmul.f32 %v341, %v461
    %v493 = vmul.f32 %v344, %v464
    %v494 = vmul.f32 %v347, %v467
    %v495 = vmul.f32 %v350, %v470
    %v496 = vmul.f32 %v353, %v473
    %v497 = vmul.f32 %v356, %v476
    %v498 = vmul.f32 %v359, %v479
    %v499 = vmul.f32 %v362, %v482
    %vm500 = vcmask 31744
    %v502 = vsel %vm500, 1.0, 0
    %v505 = vsel %vm500, %v484, 0
    %v508 = vsel %vm500, %v485, 0
    %v511 = vsel %vm500, %v486, 0
    %v514 = vsel %vm500, %v487, 0
    %v517 = vsel %vm500, %v488, 0
    %v520 = vsel %vm500, %v489, 0
    %v523 = vsel %vm500, %v490, 0
    %v526 = vsel %vm500, %v491, 0
    %v529 = vsel %vm500, %v492, 0
    %v532 = vsel %vm500, %v493, 0
    %v535 = vsel %vm500, %v494, 0
    %v538 = vsel %vm500, %v495, 0
    %v541 = vsel %vm500, %v496, 0
    %v544 = vsel %vm500, %v497, 0
    %v547 = vsel %vm500, %v498, 0
    %v550 = vsel %vm500, %v499, 0
    %552 = vmatpush.xpose.msra.mxu0 %v550
    %553 = vmatpush.xpose.msra.mxu0 %v547
    %554 = vmatpush.xpose.msra.mxu0 %v544
    %555 = vmatpush.xpose.msra.mxu0 %v541
    %556 = vmatpush.xpose.msra.mxu0 %v538
    %557 = vmatpush.xpose.msra.mxu0 %v535
    %558 = vmatpush.xpose.msra.mxu0 %v532
    %559 = vmatpush.xpose.msra.mxu0 %v529
    %560 = vmatpush.xpose.msra.mxu0 %v526
    %561 = vmatpush.xpose.msra.mxu0 %v523
    %562 = vmatpush.xpose.msra.mxu0 %v520
    %563 = vmatpush.xpose.msra.mxu0 %v517
    %564 = vmatpush.xpose.msra.mxu0 %v514
    %565 = vmatpush.xpose.msra.mxu0 %v511
    %566 = vmatpush.xpose.msra.mxu0 %v508
    %567 = vmatpush.xpose.msra.mxu0 %v505
    %568 = vmatmul.f32.gmra.mxu0 %v502
    %v569 = vpop.f32.mrf.mxu0
    %v570 = vadd.f32 0.0, %v569
    %571 = vdwg.mxu0
    %572 = vst [vmem:[#allocation2] sm:$0x1] %v570
    // Predicated region
    $region18: #{tpu_custom_call.1} parent=1 // pred_check
      _
    $region19: #{tpu_custom_call.1} parent=1 // pred_check_branch
      %574 = sbr.rel (0) target = $region21
    $region20: #{tpu_custom_call.1} parent=1 // pred_region
      %576 = vsyncadd [#allocation3], 0
      %s578 = sshll.u32 [#allocation2], 4
      %s579 = int_to_ptr.vmem [resolvable:$true] %s578
      %s580 = sshll.u32 %s4, 4
      %s581 = int_to_ptr.hbm [resolvable:$true] %s580
      %583 = dma.vmem_to_hbm [thread:$0]  %s579, 16, %s581, [#allocation3]
    $region21: #{tpu_custom_call.1} parent=1 // pred_fallthru
      _
    // Predicated region
    $region22: #{tpu_custom_call.1} parent=1 // pred_check
      _
    $region23: #{tpu_custom_call.1} parent=1 // pred_check_branch
      %585 = sbr.rel (0) target = $region25
    $region24: #{tpu_custom_call.1} parent=1 // pred_region
      %587 = dma.done [#allocation3], 16
    $region25: #{tpu_custom_call.1} parent=1 // pred_fallthru
      _
    %588 = vsyncpa [#allocation3], 1

</llo_original>
